<compile_context>
chip_gen: v6e
topology: v6e:2x2x1
jax: 0.10.0
libtpu: 0.0.40
codegen_flags: <defaults>
</compile_context>

<pallas_src>
import functools

import jax
import jax.numpy as jnp
from jax.experimental import pallas as pl
from jax.experimental.pallas import tpu as pltpu


def _gaussian_policy_kernel(x_ref,
                            w1_ref, b1_ref,
                            w2_ref, b2_ref,
                            w3_ref, b3_ref,
                            out_ref):
    # hidden layer 1: Linear + ReLU
    h = jnp.dot(x_ref[...], w1_ref[...], preferred_element_type=jnp.float32)
    h = jnp.maximum(h + b1_ref[...], 0.0)
    # hidden layer 2: Linear + ReLU
    h = jnp.dot(h, w2_ref[...], preferred_element_type=jnp.float32)
    h = jnp.maximum(h + b2_ref[...], 0.0)
    # final layer: Linear (identity out_act), fused [mean | log_var] output
    out = jnp.dot(h, w3_ref[...], preferred_element_type=jnp.float32) + b3_ref[...]
    out_ref[...] = out.astype(out_ref.dtype)


@functools.partial(jax.jit, static_argnames=("action_dim", "block_b"))
def gaussian_policy_forward(state, params, action_dim, block_b=256):
    """Returns (action_mean, action_log_var), each [B, action_dim]."""
    w1, b1, w2, b2, w3, b3 = params
    B, in_dim = state.shape
    out_dim = 2 * action_dim

    if B <= block_b:
        # Tiny problem: single invocation, everything lives fully in VMEM,
        # no grid -> no double-buffer / pipeline machinery.
        vmem_spec = pl.BlockSpec(memory_space=pltpu.MemorySpace.VMEM)
        out = pl.pallas_call(
            _gaussian_policy_kernel,
            out_shape=jax.ShapeDtypeStruct((B, out_dim), jnp.float32),
            in_specs=[vmem_spec] * 7,
            out_specs=vmem_spec,
        )(state, w1, b1, w2, b2, w3, b3)
    else:
        # Realistic RL batch: tile the batch dimension; weights/biases use
        # constant index_maps so they stay resident across grid steps.
        num_blocks = pl.cdiv(B, block_b)
        Bp = num_blocks * block_b
        x = state if Bp == B else jnp.pad(state, ((0, Bp - B), (0, 0)))

        def _const_map(i):
            return (0, 0)

        def _batch_map(i):
            return (i, 0)

        out = pl.pallas_call(
            _gaussian_policy_kernel,
            out_shape=jax.ShapeDtypeStruct((Bp, out_dim), jnp.float32),
            grid=(num_blocks,),
            in_specs=[
                pl.BlockSpec((block_b, in_dim), _batch_map),
                pl.BlockSpec(w1.shape, _const_map),
                pl.BlockSpec(b1.shape, _const_map),
                pl.BlockSpec(w2.shape, _const_map),
                pl.BlockSpec(b2.shape, _const_map),
                pl.BlockSpec(w3.shape, _const_map),
                pl.BlockSpec(b3.shape, _const_map),
            ],
            out_specs=pl.BlockSpec((block_b, out_dim), _batch_map),
            compiler_params=pltpu.CompilerParams(
                dimension_semantics=("parallel",)),
        )(x, w1, b1, w2, b2, w3, b3)
        out = out[:B]

    action_mean = out[:, :action_dim]
    action_log_var = out[:, action_dim:]
    return action_mean, action_log_var


def init_params(key, input_dim, hidden_dims, action_dim):
    """Deterministic synthetic init (uniform, PyTorch-Linear-like bounds).

    Weights stored pre-transposed as [in_dim, out_dim]; final layer stored
    fused as [hidden[-1], 2*action_dim] (mean columns first, then log_var).
    """
    dims = [input_dim] + list(hidden_dims)
    keys = jax.random.split(key, 6)
    params = []
    # two hidden linear layers
    for i in range(2):
        fan_in, fan_out = dims[i], dims[i + 1]
        bound = 1.0 / float(fan_in) ** 0.5
        w = jax.random.uniform(keys[2 * i], (fan_in, fan_out),
                               minval=-bound, maxval=bound, dtype=jnp.float32)
        b = jax.random.uniform(keys[2 * i + 1], (1, fan_out),
                               minval=-bound, maxval=bound, dtype=jnp.float32)
        params += [w, b]
    # fused final linear: hidden[-1] -> 2*action_dim
    fan_in = dims[-1]
    bound = 1.0 / float(fan_in) ** 0.5
    w3 = jax.random.uniform(keys[4], (fan_in, 2 * action_dim),
                            minval=-bound, maxval=bound, dtype=jnp.float32)
    b3 = jax.random.uniform(keys[5], (1, 2 * action_dim),
                            minval=-bound, maxval=bound, dtype=jnp.float32)
    params += [w3, b3]
    return tuple(params)


def reference_forward(state, params, action_dim):
    """Pure-JAX reference of GaussianPolicyNetwork.forward."""
    w1, b1, w2, b2, w3, b3 = params
    h = jnp.maximum(state @ w1 + b1, 0.0)
    h = jnp.maximum(h @ w2 + b2, 0.0)
    out = h @ w3 + b3
    return out[:, :action_dim], out[:, action_dim:]


if __name__ == "__main__":
    input_dim = 32
    hidden_dims = [32, 32]
    action_dim = 4   # e.g. Box action space with shape (4,)

    key = jax.random.PRNGKey(0)
    k_state, k_params, k_big = jax.random.split(key, 3)
    params = init_params(k_params, input_dim, hidden_dims, action_dim)

    # --- small batch: gridless single-invocation path ---
    batch = 8
    state = jax.random.normal(k_state, (batch, input_dim), dtype=jnp.float32)
    mean, log_var = gaussian_policy_forward(state, params, action_dim)
    jax.block_until_ready((mean, log_var))
    ref_mean, ref_log_var = reference_forward(state, params, action_dim)
    assert mean.shape == (batch, action_dim)
    assert log_var.shape == (batch, action_dim)
    assert jnp.allclose(mean, ref_mean, atol=1e-4, rtol=1e-4)
    assert jnp.allclose(log_var, ref_log_var, atol=1e-4, rtol=1e-4)

    # --- larger batch: batch-tiled path (weights resident, parallel axis) ---
    big_batch = 300   # not a multiple of block_b -> exercises padding too
    big_state = jax.random.normal(k_big, (big_batch, input_dim), dtype=jnp.float32)
    big_mean, big_log_var = gaussian_policy_forward(big_state, params, action_dim)
    jax.block_until_ready((big_mean, big_log_var))
    ref_big_mean, ref_big_log_var = reference_forward(big_state, params, action_dim)
    assert big_mean.shape == (big_batch, action_dim)
    assert big_log_var.shape == (big_batch, action_dim)
    assert jnp.allclose(big_mean, ref_big_mean, atol=1e-4, rtol=1e-4)
    assert jnp.allclose(big_log_var, ref_big_log_var, atol=1e-4, rtol=1e-4)

    # TODO(synk): sample()/evaluate_actions() need RNG sampling + tanh-squash
    # log-probs; only forward() (the hot matmul path) is implemented in Pallas.
    print("KERNEL_OK")
</pallas_src>

<mosaic_0001>
module attributes {stable_mosaic.version = 11 : i64} {
  func.func @_gaussian_policy_kernel(%arg0: memref<8x32xf32, #tpu.memory_space<vmem>>, %arg1: memref<32x32xf32, #tpu.memory_space<vmem>>, %arg2: memref<1x32xf32, #tpu.memory_space<vmem>>, %arg3: memref<32x32xf32, #tpu.memory_space<vmem>>, %arg4: memref<1x32xf32, #tpu.memory_space<vmem>>, %arg5: memref<32x8xf32, #tpu.memory_space<vmem>>, %arg6: memref<1x8xf32, #tpu.memory_space<vmem>>, %arg7: memref<8x8xf32, #tpu.memory_space<vmem>>) attributes {dimension_semantics = [], scalar_prefetch = 0 : i64, scratch_operands = 0 : i64, tpu.core_type = #tpu.core_type<tc>} {
    %c0 = arith.constant 0 : index
    %c0_0 = arith.constant 0 : index
    %0 = vector.load %arg0[%c0, %c0_0] : memref<8x32xf32, #tpu.memory_space<vmem>>, vector<8x32xf32>
    %c0_1 = arith.constant 0 : index
    %c0_2 = arith.constant 0 : index
    %1 = vector.load %arg1[%c0_1, %c0_2] : memref<32x32xf32, #tpu.memory_space<vmem>>, vector<32x32xf32>
    %cst = arith.constant dense<0.000000e+00> : vector<8x32xf32>
    %2 = tpu.matmul %0, %1, %cst {dimension_numbers = #tpu.dot_dimension_numbers<[1], [0], [0], [1], [0, 0, 1, 1], [], []>} : vector<8x32xf32>, vector<32x32xf32>, vector<8x32xf32> -> vector<8x32xf32>
    %c0_3 = arith.constant 0 : index
    %c0_4 = arith.constant 0 : index
    %3 = vector.load %arg2[%c0_3, %c0_4] : memref<1x32xf32, #tpu.memory_space<vmem>>, vector<1x32xf32>
    %4 = vector.broadcast %3 : vector<1x32xf32> to vector<8x32xf32>
    %5 = arith.addf %2, %4 : vector<8x32xf32>
    %cst_5 = arith.constant 0.000000e+00 : f32
    %6 = vector.broadcast %cst_5 : f32 to vector<8x32xf32>
    %7 = arith.maximumf %5, %6 : vector<8x32xf32>
    %c0_6 = arith.constant 0 : index
    %c0_7 = arith.constant 0 : index
    %8 = vector.load %arg3[%c0_6, %c0_7] : memref<32x32xf32, #tpu.memory_space<vmem>>, vector<32x32xf32>
    %cst_8 = arith.constant dense<0.000000e+00> : vector<8x32xf32>
    %9 = tpu.matmul %7, %8, %cst_8 {dimension_numbers = #tpu.dot_dimension_numbers<[1], [0], [0], [1], [0, 0, 1, 1], [], []>} : vector<8x32xf32>, vector<32x32xf32>, vector<8x32xf32> -> vector<8x32xf32>
    %c0_9 = arith.constant 0 : index
    %c0_10 = arith.constant 0 : index
    %10 = vector.load %arg4[%c0_9, %c0_10] : memref<1x32xf32, #tpu.memory_space<vmem>>, vector<1x32xf32>
    %11 = vector.broadcast %10 : vector<1x32xf32> to vector<8x32xf32>
    %12 = arith.addf %9, %11 : vector<8x32xf32>
    %cst_11 = arith.constant 0.000000e+00 : f32
    %13 = vector.broadcast %cst_11 : f32 to vector<8x32xf32>
    %14 = arith.maximumf %12, %13 : vector<8x32xf32>
    %c0_12 = arith.constant 0 : index
    %c0_13 = arith.constant 0 : index
    %15 = vector.load %arg5[%c0_12, %c0_13] : memref<32x8xf32, #tpu.memory_space<vmem>>, vector<32x8xf32>
    %cst_14 = arith.constant dense<0.000000e+00> : vector<8x8xf32>
    %16 = tpu.matmul %14, %15, %cst_14 {dimension_numbers = #tpu.dot_dimension_numbers<[1], [0], [0], [1], [0, 0, 1, 1], [], []>} : vector<8x32xf32>, vector<32x8xf32>, vector<8x8xf32> -> vector<8x8xf32>
    %c0_15 = arith.constant 0 : index
    %c0_16 = arith.constant 0 : index
    %17 = vector.load %arg6[%c0_15, %c0_16] : memref<1x8xf32, #tpu.memory_space<vmem>>, vector<1x8xf32>
    %18 = vector.broadcast %17 : vector<1x8xf32> to vector<8x8xf32>
    %19 = arith.addf %16, %18 : vector<8x8xf32>
    %c0_17 = arith.constant 0 : index
    %c0_18 = arith.constant 0 : index
    %20 = vector.load %arg7[%c0_17, %c0_18] : memref<8x8xf32, #tpu.memory_space<vmem>>, vector<8x8xf32>
    tpu.vector_store %arg7[%c0_17, %c0_18], %19 {strides = array<i32>} : memref<8x8xf32, #tpu.memory_space<vmem>>, vector<8x8xf32>,
    return
  }
}

</mosaic_0001>

<llo_original>
// kernel: gaussian_policy_forward.1
$region0: #{gaussian_policy_forward.1}
  #allocation0 [shape = 'u32[]', space=smem, size = 0x4, offset = 0x4, fixed_abs, tag = 'smem constant byte address 0x4 - core index']
  #allocation1 [shape = 'u32[144,128]{1,0:T(1,128)}', space=vmem, size = 0x12000, scoped, tag = 'internal scratch']
  %s0 = inlined_call_operand.vmem [shape: f32[8,32], index: 0, kind: input, shape index: {}]
  %s1 = inlined_call_operand.vmem [shape: f32[32,32], index: 1, kind: input, shape index: {}]
  %s2 = inlined_call_operand.vmem [shape: f32[1,32], index: 2, kind: input, shape index: {}]
  %s3 = inlined_call_operand.hbm [shape: f32[32,32], index: 3, kind: input, shape index: {}]
  %s4 = inlined_call_operand.hbm [shape: f32[1,32], index: 4, kind: input, shape index: {}]
  %s5 = inlined_call_operand.vmem [shape: f32[32,8], index: 5, kind: input, shape index: {}]
  %s6 = inlined_call_operand.vmem [shape: f32[1,8], index: 6, kind: input, shape index: {}]
  %s7 = inlined_call_operand.vmem [shape: f32[8,8], index: 7, kind: output, shape index: {}]
  %s8 = sld [smem:[#allocation0]]
  $region46: #{gaussian_policy_forward.1} parent=0
    _
  %s10 = ssub.s32 1, %s8
  %s11 = scalar_select 0, %s10, %s8
  $region1: #{gaussian_policy_forward.1} parent=0
    #allocation2 [shape = 'u8[16384]{0}', space=vmem, size = 0x4000, scoped, tag = 'input window, operand 3, single buffered']
    #allocation3 [shape = 's32[1]{0}', space=sflag, size = 0x4, scoped, tag = 'scoped memory for gaussian_policy_forward.1']
    #allocation4 [shape = 'u8[512]{0}', space=vmem, size = 0x400, scoped, tag = 'input window, operand 4, single buffered']
    #allocation5 [shape = 's32[1]{0}', space=sflag, size = 0x4, scoped, tag = 'scoped memory for gaussian_policy_forward.1']
    %12 = vsyncpa [#allocation3], 0
    %13 = vsyncpa [#allocation5], 0
    // Predicated region
    $region2: #{gaussian_policy_forward.1} parent=1 // pred_check
      _
    $region3: #{gaussian_policy_forward.1} parent=1 // pred_check_branch
      %15 = sbr.rel (0) target = $region5
    $region4: #{gaussian_policy_forward.1} parent=1 // pred_region
      _
    $region5: #{gaussian_policy_forward.1} parent=1 // pred_fallthru
      _
    // Predicated region
    $region6: #{gaussian_policy_forward.1} parent=1 // pred_check
      _
    $region7: #{gaussian_policy_forward.1} parent=1 // pred_check_branch
      %17 = sbr.rel (0) target = $region9
    $region8: #{gaussian_policy_forward.1} parent=1 // pred_region
      _
    $region9: #{gaussian_policy_forward.1} parent=1 // pred_fallthru
      _
    // Predicated region
    $region10: #{gaussian_policy_forward.1} parent=1 // pred_check
      _
    $region11: #{gaussian_policy_forward.1} parent=1 // pred_check_branch
      %19 = sbr.rel (0) target = $region13
    $region12: #{gaussian_policy_forward.1} parent=1 // pred_region
      _
    $region13: #{gaussian_policy_forward.1} parent=1 // pred_fallthru
      _
    // Predicated region
    $region14: #{gaussian_policy_forward.1} parent=1 // pred_check
      _
    $region15: #{gaussian_policy_forward.1} parent=1 // pred_check_branch
      %21 = sbr.rel (0) target = $region17
    $region16: #{gaussian_policy_forward.1} parent=1 // pred_region
      %s23 = ssub.s32 512, 512
      %24 = vsyncadd [#allocation3], %s23
      %s25 = sshll.u32 [#allocation2], 4
      %s26 = int_to_ptr.vmem [resolvable:$true] %s25
      %31 = dma.hbm_to_vmem [thread:$0]  %s3, 512, %s26, [#allocation3], 128, 128, 8
    $region17: #{gaussian_policy_forward.1} parent=1 // pred_fallthru
      _
    // Predicated region
    $region18: #{gaussian_policy_forward.1} parent=1 // pred_check
      _
    $region19: #{gaussian_policy_forward.1} parent=1 // pred_check_branch
      %33 = sbr.rel (0) target = $region21
    $region20: #{gaussian_policy_forward.1} parent=1 // pred_region
      %s35 = ssub.s32 16, 16
      %36 = vsyncadd [#allocation5], %s35
      %s38 = sshll.u32 [#allocation4], 4
      %s39 = int_to_ptr.vmem [resolvable:$true] %s38
      %41 = dma.hbm_to_vmem [thread:$0]  %s4, 16, %s39, [#allocation5]
    $region21: #{gaussian_policy_forward.1} parent=1 // pred_fallthru
      _
    // Predicated region
    $region22: #{gaussian_policy_forward.1} parent=1 // pred_check
      _
    $region23: #{gaussian_policy_forward.1} parent=1 // pred_check_branch
      %43 = sbr.rel (0) target = $region25
    $region24: #{gaussian_policy_forward.1} parent=1 // pred_region
      _
    $region25: #{gaussian_policy_forward.1} parent=1 // pred_fallthru
      _
    // Predicated region
    $region26: #{gaussian_policy_forward.1} parent=1 // pred_check
      _
    $region27: #{gaussian_policy_forward.1} parent=1 // pred_check_branch
      %45 = sbr.rel (0) target = $region29
    $region28: #{gaussian_policy_forward.1} parent=1 // pred_region
      _
    $region29: #{gaussian_policy_forward.1} parent=1 // pred_fallthru
      _
    // Predicated region
    $region30: #{gaussian_policy_forward.1} parent=1 // pred_check
      _
    $region31: #{gaussian_policy_forward.1} parent=1 // pred_check_branch
      %47 = sbr.rel (0) target = $region33
    $region32: #{gaussian_policy_forward.1} parent=1 // pred_region
      %48 = dma.done [#allocation3], 512
    $region33: #{gaussian_policy_forward.1} parent=1 // pred_fallthru
      _
    // Predicated region
    $region34: #{gaussian_policy_forward.1} parent=1 // pred_check
      _
    $region35: #{gaussian_policy_forward.1} parent=1 // pred_check_branch
      %50 = sbr.rel (0) target = $region37
    $region36: #{gaussian_policy_forward.1} parent=1 // pred_region
      %51 = dma.done [#allocation5], 16
    $region37: #{gaussian_policy_forward.1} parent=1 // pred_fallthru
      _
    %v52 = vld [vmem:[%s0] sm:$0xff]
    %v53 = vld [vmem:[%s1] sm:$0xff]
    %v54 = vld [vmem:[%s1 + $0x8] sm:$0xff]
    %v55 = vld [vmem:[%s1 + $0x10] sm:$0xff]
    %v56 = vld [vmem:[%s1 + $0x18] sm:$0xff]
    %v57 = vld [vmem:[%s2] sm:$0x1]
    %v59 = vlaneseq
    %v60 = vshrl.u32 %v59, 7
    %v61 = vsub.s32 0, %v60
    %v62 = vrot.slane %v57, %v61
    %vm64 = vcmask 261120
    %v66 = vsel %vm64, %v52, 0
    %68 = vmatprep.subr.mxu0 0.0
    %69 = vmatpush1.msra.mxu0 0.0
    %70 = vmatprep.subr.mxu0 0.0
    %71 = vmatpush1.msra.mxu0 0.0
    %72 = vmatprep.subr.mxu0 0.0
    %73 = vmatpush1.msra.mxu0 0.0
    %74 = vmatprep.subr.mxu0 0.0
    %75 = vmatpush1.msra.mxu0 0.0
    %76 = vmatprep.subr.mxu0 0.0
    %77 = vmatpush1.msra.mxu0 0.0
    %78 = vmatprep.subr.mxu0 0.0
    %79 = vmatpush1.msra.mxu0 0.0
    %80 = vmatprep.subr.mxu0 0.0
    %81 = vmatpush1.msra.mxu0 0.0
    %82 = vmatprep.subr.mxu0 0.0
    %83 = vmatpush1.msra.mxu0 0.0
    %84 = vmatprep.subr.mxu0 0.0
    %85 = vmatpush1.msra.mxu0 0.0
    %86 = vmatprep.subr.mxu0 0.0
    %87 = vmatpush1.msra.mxu0 0.0
    %88 = vmatprep.subr.mxu0 0.0
    %89 = vmatpush1.msra.mxu0 0.0
    %90 = vmatprep.subr.mxu0 0.0
    %91 = vmatpush1.msra.mxu0 0.0
    %92 = vmatprep.subr.mxu0 0.0
    %93 = vmatpush1.msra.mxu0 %v56
    %94 = vmatprep.subr.mxu0 0.0
    %95 = vmatpush1.msra.mxu0 %v55
    %96 = vmatprep.subr.mxu0 0.0
    %97 = vmatpush1.msra.mxu0 %v54
    %98 = vmatprep.subr.mxu0 0.0
    %99 = vmatpush1.msra.mxu0 %v53
    %100 = vmatprep.subr.mxu0 0.0
    %101 = vmatpush2.msra.mxu0 0.0
    %102 = vmatprep.subr.mxu0 0.0
    %103 = vmatpush2.msra.mxu0 0.0
    %104 = vmatprep.subr.mxu0 0.0
    %105 = vmatpush2.msra.mxu0 0.0
    %106 = vmatprep.subr.mxu0 0.0
    %107 = vmatpush2.msra.mxu0 0.0
    %108 = vmatprep.subr.mxu0 0.0
    %109 = vmatpush2.msra.mxu0 0.0
    %110 = vmatprep.subr.mxu0 0.0
    %111 = vmatpush2.msra.mxu0 0.0
    %112 = vmatprep.subr.mxu0 0.0
    %113 = vmatpush2.msra.mxu0 0.0
    %114 = vmatprep.subr.mxu0 0.0
    %115 = vmatpush2.msra.mxu0 0.0
    %116 = vmatprep.subr.mxu0 0.0
    %117 = vmatpush2.msra.mxu0 0.0
    %118 = vmatprep.subr.mxu0 0.0
    %119 = vmatpush2.msra.mxu0 0.0
    %120 = vmatprep.subr.mxu0 0.0
    %121 = vmatpush2.msra.mxu0 0.0
    %122 = vmatprep.subr.mxu0 0.0
    %123 = vmatpush2.msra.mxu0 0.0
    %124 = vmatprep.subr.mxu0 0.0
    %125 = vmatpush2.msra.mxu0 0.0
    %126 = vmatprep.subr.mxu0 0.0
    %127 = vmatpush2.msra.mxu0 0.0
    %128 = vmatprep.subr.mxu0 0.0
    %129 = vmatpush2.msra.mxu0 0.0
    %130 = vmatprep.subr.mxu0 0.0
    %131 = vmatpush2.msra.mxu0 0.0
    %132 = vmatprep.mubr.f32.mxu0 0.0
    %133 = vmatmul.mubr.f32.gmra.mxu0 %v66
    %v134 = vpop.f32.mrf.mxu0
    %v135 = vadd.f32 %v62, %v134
    %v136 = vpop.f32.mrf.mxu0
    %137 = vdwg.mxu0
    %v138 = vmax.f32 %v135, 0.0
    %v139 = vld [vmem:[#allocation2] sm:$0xff]
    %v140 = vld [vmem:[#allocation2 + $0x8] sm:$0xff]
    %v141 = vld [vmem:[#allocation2 + $0x10] sm:$0xff]
    %v142 = vld [vmem:[#allocation2 + $0x18] sm:$0xff]
    %v143 = vld [vmem:[#allocation4] sm:$0x1]
    %v145 = vlaneseq
    %v146 = vshrl.u32 %v145, 7
    %v147 = vsub.s32 0, %v146
    %v148 = vrot.slane %v143, %v147
    %v151 = vsel %vm64, %v138, 0
    %153 = vmatprep.subr.mxu0 0.0
    %154 = vmatpush1.msra.mxu0 0.0
    %155 = vmatprep.subr.mxu0 0.0
    %156 = vmatpush1.msra.mxu0 0.0
    %157 = vmatprep.subr.mxu0 0.0
    %158 = vmatpush1.msra.mxu0 0.0
    %159 = vmatprep.subr.mxu0 0.0
    %160 = vmatpush1.msra.mxu0 0.0
    %161 = vmatprep.subr.mxu0 0.0
    %162 = vmatpush1.msra.mxu0 0.0
    %163 = vmatprep.subr.mxu0 0.0
    %164 = vmatpush1.msra.mxu0 0.0
    %165 = vmatprep.subr.mxu0 0.0
    %166 = vmatpush1.msra.mxu0 0.0
    %167 = vmatprep.subr.mxu0 0.0
    %168 = vmatpush1.msra.mxu0 0.0
    %169 = vmatprep.subr.mxu0 0.0
    %170 = vmatpush1.msra.mxu0 0.0
    %171 = vmatprep.subr.mxu0 0.0
    %172 = vmatpush1.msra.mxu0 0.0
    %173 = vmatprep.subr.mxu0 0.0
    %174 = vmatpush1.msra.mxu0 0.0
    %175 = vmatprep.subr.mxu0 0.0
    %176 = vmatpush1.msra.mxu0 0.0
    %177 = vmatprep.subr.mxu0 0.0
    %178 = vmatpush1.msra.mxu0 %v142
    %179 = vmatprep.subr.mxu0 0.0
    %180 = vmatpush1.msra.mxu0 %v141
    %181 = vmatprep.subr.mxu0 0.0
    %182 = vmatpush1.msra.mxu0 %v140
    %183 = vmatprep.subr.mxu0 0.0
    %184 = vmatpush1.msra.mxu0 %v139
    %185 = vmatprep.subr.mxu0 0.0
    %186 = vmatpush2.msra.mxu0 0.0
    %187 = vmatprep.subr.mxu0 0.0
    %188 = vmatpush2.msra.mxu0 0.0
    %189 = vmatprep.subr.mxu0 0.0
    %190 = vmatpush2.msra.mxu0 0.0
    %191 = vmatprep.subr.mxu0 0.0
    %192 = vmatpush2.msra.mxu0 0.0
    %193 = vmatprep.subr.mxu0 0.0
    %194 = vmatpush2.msra.mxu0 0.0
    %195 = vmatprep.subr.mxu0 0.0
    %196 = vmatpush2.msra.mxu0 0.0
    %197 = vmatprep.subr.mxu0 0.0
    %198 = vmatpush2.msra.mxu0 0.0
    %199 = vmatprep.subr.mxu0 0.0
    %200 = vmatpush2.msra.mxu0 0.0
    %201 = vmatprep.subr.mxu0 0.0
    %202 = vmatpush2.msra.mxu0 0.0
    %203 = vmatprep.subr.mxu0 0.0
    %204 = vmatpush2.msra.mxu0 0.0
    %205 = vmatprep.subr.mxu0 0.0
    %206 = vmatpush2.msra.mxu0 0.0
    %207 = vmatprep.subr.mxu0 0.0
    %208 = vmatpush2.msra.mxu0 0.0
    %209 = vmatprep.subr.mxu0 0.0
    %210 = vmatpush2.msra.mxu0 0.0
    %211 = vmatprep.subr.mxu0 0.0
    %212 = vmatpush2.msra.mxu0 0.0
    %213 = vmatprep.subr.mxu0 0.0
    %214 = vmatpush2.msra.mxu0 0.0
    %215 = vmatprep.subr.mxu0 0.0
    %216 = vmatpush2.msra.mxu0 0.0
    %217 = vmatprep.mubr.f32.mxu0 0.0
    %218 = vmatmul.mubr.f32.gmra.mxu0 %v151
    %v219 = vpop.f32.mrf.mxu0
    %v220 = vadd.f32 %v148, %v219
    %v221 = vpop.f32.mrf.mxu0
    %222 = vdwg.mxu0
    %v223 = vmax.f32 %v220, 0.0
    %v224 = vld [vmem:[%s5] sm:$0xff]
    %v225 = vld [vmem:[%s5 + $0x8] sm:$0xff]
    %v226 = vld [vmem:[%s5 + $0x10] sm:$0xff]
    %v227 = vld [vmem:[%s5 + $0x18] sm:$0xff]
    %v228 = vld [vmem:[%s6] sm:$0x1]
    %v230 = vlaneseq
    %v231 = vshrl.u32 %v230, 7
    %v232 = vsub.s32 0, %v231
    %v233 = vrot.slane %v228, %v232
    %v236 = vsel %vm64, %v223, 0
    %238 = vmatprep.subr.mxu0 0.0
    %239 = vmatpush1.msra.mxu0 0.0
    %240 = vmatprep.subr.mxu0 0.0
    %241 = vmatpush1.msra.mxu0 0.0
    %242 = vmatprep.subr.mxu0 0.0
    %243 = vmatpush1.msra.mxu0 0.0
    %244 = vmatprep.subr.mxu0 0.0
    %245 = vmatpush1.msra.mxu0 0.0
    %246 = vmatprep.subr.mxu0 0.0
    %247 = vmatpush1.msra.mxu0 0.0
    %248 = vmatprep.subr.mxu0 0.0
    %249 = vmatpush1.msra.mxu0 0.0
    %250 = vmatprep.subr.mxu0 0.0
    %251 = vmatpush1.msra.mxu0 0.0
    %252 = vmatprep.subr.mxu0 0.0
    %253 = vmatpush1.msra.mxu0 0.0
    %254 = vmatprep.subr.mxu0 0.0
    %255 = vmatpush1.msra.mxu0 0.0
    %256 = vmatprep.subr.mxu0 0.0
    %257 = vmatpush1.msra.mxu0 0.0
    %258 = vmatprep.subr.mxu0 0.0
    %259 = vmatpush1.msra.mxu0 0.0
    %260 = vmatprep.subr.mxu0 0.0
    %261 = vmatpush1.msra.mxu0 0.0
    %262 = vmatprep.subr.mxu0 0.0
    %263 = vmatpush1.msra.mxu0 %v227
    %264 = vmatprep.subr.mxu0 0.0
    %265 = vmatpush1.msra.mxu0 %v226
    %266 = vmatprep.subr.mxu0 0.0
    %267 = vmatpush1.msra.mxu0 %v225
    %268 = vmatprep.subr.mxu0 0.0
    %269 = vmatpush1.msra.mxu0 %v224
    %270 = vmatprep.subr.mxu0 0.0
    %271 = vmatpush2.msra.mxu0 0.0
    %272 = vmatprep.subr.mxu0 0.0
    %273 = vmatpush2.msra.mxu0 0.0
    %274 = vmatprep.subr.mxu0 0.0
    %275 = vmatpush2.msra.mxu0 0.0
    %276 = vmatprep.subr.mxu0 0.0
    %277 = vmatpush2.msra.mxu0 0.0
    %278 = vmatprep.subr.mxu0 0.0
    %279 = vmatpush2.msra.mxu0 0.0
    %280 = vmatprep.subr.mxu0 0.0
    %281 = vmatpush2.msra.mxu0 0.0
    %282 = vmatprep.subr.mxu0 0.0
    %283 = vmatpush2.msra.mxu0 0.0
    %284 = vmatprep.subr.mxu0 0.0
    %285 = vmatpush2.msra.mxu0 0.0
    %286 = vmatprep.subr.mxu0 0.0
    %287 = vmatpush2.msra.mxu0 0.0
    %288 = vmatprep.subr.mxu0 0.0
    %289 = vmatpush2.msra.mxu0 0.0
    %290 = vmatprep.subr.mxu0 0.0
    %291 = vmatpush2.msra.mxu0 0.0
    %292 = vmatprep.subr.mxu0 0.0
    %293 = vmatpush2.msra.mxu0 0.0
    %294 = vmatprep.subr.mxu0 0.0
    %295 = vmatpush2.msra.mxu0 0.0
    %296 = vmatprep.subr.mxu0 0.0
    %297 = vmatpush2.msra.mxu0 0.0
    %298 = vmatprep.subr.mxu0 0.0
    %299 = vmatpush2.msra.mxu0 0.0
    %300 = vmatprep.subr.mxu0 0.0
    %301 = vmatpush2.msra.mxu0 0.0
    %302 = vmatprep.mubr.f32.mxu0 0.0
    %303 = vmatmul.mubr.f32.gmra.mxu0 %v236
    %v304 = vpop.f32.mrf.mxu0
    %v305 = vadd.f32 %v233, %v304
    %v306 = vpop.f32.mrf.mxu0
    %307 = vdwg.mxu0
    %vm308 = vcmask 64512
    %309 = vst.msk [vmem:[%s7] sm:$0xff] %vm308, %v305
    // Predicated region
    $region38: #{gaussian_policy_forward.1} parent=1 // pred_check
      _
    $region39: #{gaussian_policy_forward.1} parent=1 // pred_check_branch
      %311 = sbr.rel (0) target = $region41
    $region40: #{gaussian_policy_forward.1} parent=1 // pred_region
      _
    $region41: #{gaussian_policy_forward.1} parent=1 // pred_fallthru
      _
    // Predicated region
    $region42: #{gaussian_policy_forward.1} parent=1 // pred_check
      _
    $region43: #{gaussian_policy_forward.1} parent=1 // pred_check_branch
      %313 = sbr.rel (0) target = $region45
    $region44: #{gaussian_policy_forward.1} parent=1 // pred_region
      _
    $region45: #{gaussian_policy_forward.1} parent=1 // pred_fallthru
      _
    %314 = vsyncpa [#allocation3], 1
    %315 = vsyncpa [#allocation5], 1

</llo_original>
